<compile_context>
chip_gen: v5e
topology: v5e:2x2
jax: 0.10.0
libtpu: 0.0.40
codegen_flags: <defaults>
</compile_context>

<pallas_src>
import functools
import math

import jax
import jax.numpy as jnp
from jax.experimental import pallas as pl
from jax.experimental.pallas import tpu as pltpu


_ACT = {
    "silu": jax.nn.silu,
    "tanh": jnp.tanh,
    "sigmoid": jax.nn.sigmoid,
    "ssp": lambda t: jax.nn.softplus(t) - math.log(2.0),  # ShiftedSoftplus
}


def _geb_kernel(x_ref, v_ref, w1_ref, w2_ref, wu1_ref, bu1_ref, wu2_ref,
                bu2_ref, xo_ref, vo_ref, *, hidden, out_ch, act,
                scalar_activation):
    f32 = jnp.float32
    x = x_ref[...]                       # (tn, H)
    vf = v_ref[...]                      # (tn, 3H) lanes = [vx | vy | vz]
    tn = x.shape[0]

    # Stack the three spatial components along sublanes -> (3*tn, H) so each
    # projection weight needs a single MXU matmul (shared RHS, 3x rows).
    v_stack = jnp.concatenate(
        [vf[:, 0:hidden], vf[:, hidden:2 * hidden], vf[:, 2 * hidden:3 * hidden]],
        axis=0)

    p1 = jnp.dot(v_stack, w1_ref[...], preferred_element_type=f32)   # (3tn, H)
    p2 = jnp.dot(v_stack, w2_ref[...], preferred_element_type=f32)   # (3tn, O)

    # L2 norm over the 3 spatial components (sublane-aligned slices, free).
    q = p1 * p1
    vec1 = jnp.sqrt(q[0:tn] + q[tn:2 * tn] + q[2 * tn:3 * tn])       # (tn, H)

    # update_net[0] on concat([x, vec1], -1).
    xc = jnp.concatenate([x, vec1.astype(x.dtype)], axis=-1)         # (tn, 2H)
    h = jnp.dot(xc, wu1_ref[...], preferred_element_type=f32) + bu1_ref[...]
    h = act(h)                                                       # (tn, I)

    # update_net[2]: one matmul for both the scalar half and the gate half.
    out2 = (jnp.dot(h.astype(wu2_ref.dtype), wu2_ref[...],
                    preferred_element_type=f32) + bu2_ref[...])      # (tn, 2O)
    x_out = out2[:, :out_ch]
    gate = out2[:, out_ch:]
    if scalar_activation:
        x_out = act(x_out)

    xo_ref[...] = x_out.astype(xo_ref.dtype)
    vo_ref[...] = jnp.concatenate(
        [gate * p2[0:tn], gate * p2[tn:2 * tn], gate * p2[2 * tn:3 * tn]],
        axis=-1).astype(vo_ref.dtype)                                # (tn, 3O)


def _round_up(a, m):
    return ((a + m - 1) // m) * m


def _pick_row_tile(n, block_n):
    # Biggest tile <= block_n that (a) does not exceed the 8-rounded row count
    # and (b) leaves >=4 grid steps for large N (v7x has 2 TensorCores; the
    # "parallel" axis shards steps across them) -- but never below 256 rows,
    # where the ~0.35us per-step overhead starts to dominate.
    occupancy_cap = max(256, _round_up(pl.cdiv(n, 4), 8))
    return max(8, min(int(block_n), _round_up(n, 8), occupancy_cap))


def gated_equivariant_block(x, v, params, *, activation="silu",
                            scalar_activation=False, block_n=512,
                            use_bf16_inputs=False):
    """Pallas forward of GatedEquivariantBlock.

    x: (N, H), v: (N, 3, H).
    params (weights stored as (in, out), i.e. the transpose of torch Linear):
      w1 (H, H), w2 (H, O), wu1 (2H, I), bu1 (I,), wu2 (I, 2O), bu2 (2O,).
    Returns (x_out (N, O), v_out (N, 3, O)) in float32.
    """
    n, hidden = x.shape
    assert v.shape == (n, 3, hidden)
    out_ch = params["w2"].shape[1]
    inter = params["wu1"].shape[1]
    act = _ACT[activation]

    in_dtype = jnp.bfloat16 if use_bf16_inputs else jnp.float32
    x_in = x.astype(in_dtype)
    # Free row-major reshape (bitcast): no HBM copy, unlike slicing v[:, c, :].
    v_flat = v.reshape(n, 3 * hidden).astype(in_dtype)

    w1 = params["w1"].astype(in_dtype)
    w2 = params["w2"].astype(in_dtype)
    wu1 = params["wu1"].astype(in_dtype)
    wu2 = params["wu2"].astype(in_dtype)
    bu1 = params["bu1"].reshape(1, inter).astype(jnp.float32)
    bu2 = params["bu2"].reshape(1, 2 * out_ch).astype(jnp.float32)

    tn = _pick_row_tile(n, block_n)
    grid = (pl.cdiv(n, tn),)

    # Scoped-VMEM budget: double-buffered streaming tiles + resident weights.
    ib = jnp.dtype(in_dtype).itemsize
    stream_bytes = 2 * (tn * 4 * hidden * ib + tn * 4 * out_ch * 4)
    weight_bytes = 2 * ((hidden * hidden + hidden * out_ch
                         + 2 * hidden * inter + inter * 2 * out_ch) * ib
                        + (inter + 2 * out_ch) * 4)
    vmem_limit = min(64 << 20,
                     max(32 << 20,
                         int(1.5 * (stream_bytes + weight_bytes)) + (4 << 20)))

    kernel = functools.partial(_geb_kernel, hidden=hidden, out_ch=out_ch,
                               act=act,
                               scalar_activation=bool(scalar_activation))

    row_h = pl.BlockSpec((tn, hidden), lambda i: (i, 0))
    row_3h = pl.BlockSpec((tn, 3 * hidden), lambda i: (i, 0))
    full = lambda shape: pl.BlockSpec(shape, lambda i: (0, 0))

    x_out, v_out_flat = pl.pallas_call(
        kernel,
        out_shape=(jax.ShapeDtypeStruct((n, out_ch), jnp.float32),
                   jax.ShapeDtypeStruct((n, 3 * out_ch), jnp.float32)),
        grid=grid,
        in_specs=[
            row_h,                                # x
            row_3h,                               # v (flattened spatial axis)
            full((hidden, hidden)),               # w1 (vec1_proj)
            full((hidden, out_ch)),               # w2 (vec2_proj)
            full((2 * hidden, inter)),            # wu1 (update_net[0])
            full((1, inter)),                     # b1
            full((inter, 2 * out_ch)),            # wu2 (update_net[2])
            full((1, 2 * out_ch)),                # b2
        ],
        out_specs=(pl.BlockSpec((tn, out_ch), lambda i: (i, 0)),
                   pl.BlockSpec((tn, 3 * out_ch), lambda i: (i, 0))),
        compiler_params=pltpu.CompilerParams(
            dimension_semantics=("parallel",),
            vmem_limit_bytes=vmem_limit),
    )(x_in, v_flat, w1, w2, wu1, bu1, wu2, bu2)

    # Free reshape back to (N, 3, O): no post-kernel stack/copy.
    return x_out, v_out_flat.reshape(n, 3, out_ch)


def init_params(key, hidden, out_ch, intermediate=None):
    """Xavier-uniform weights (as in reset_parameters); small random biases."""
    if intermediate is None:
        intermediate = hidden
    ks = jax.random.split(key, 6)

    def xavier(k, fan_in, fan_out):
        limit = math.sqrt(6.0 / (fan_in + fan_out))
        return jax.random.uniform(k, (fan_in, fan_out), jnp.float32,
                                  -limit, limit)

    return {
        "w1": xavier(ks[0], hidden, hidden),
        "w2": xavier(ks[1], hidden, out_ch),
        "wu1": xavier(ks[2], 2 * hidden, intermediate),
        "bu1": 0.1 * jax.random.normal(ks[3], (intermediate,), jnp.float32),
        "wu2": xavier(ks[4], intermediate, 2 * out_ch),
        "bu2": 0.1 * jax.random.normal(ks[5], (2 * out_ch,), jnp.float32),
    }


def gated_equivariant_block_ref(x, v, params, *, activation="silu",
                                scalar_activation=False):
    """Pure-JAX reference: line-for-line port of the torch forward."""
    act = _ACT[activation]
    out_ch = params["w2"].shape[1]
    vec1 = jnp.linalg.norm(jnp.einsum("nch,hk->nck", v, params["w1"]), axis=-2)
    vec2 = jnp.einsum("nch,ho->nco", v, params["w2"])
    xc = jnp.concatenate([x, vec1], axis=-1)
    h = act(xc @ params["wu1"] + params["bu1"])
    out = h @ params["wu2"] + params["bu2"]
    x_out, gate = out[:, :out_ch], out[:, out_ch:]
    v_out = gate[:, None, :] * vec2
    if scalar_activation:
        x_out = act(x_out)
    return x_out, v_out


if __name__ == "__main__":
    key = jax.random.PRNGKey(0)
    N, HIDDEN, OUT = 8, 32, 16          # seq=8 atoms, hidden=32, out=16
    kx, kv, kp = jax.random.split(key, 3)
    x = jax.random.normal(kx, (N, HIDDEN), dtype=jnp.float32)
    v = jax.random.normal(kv, (N, 3, HIDDEN), dtype=jnp.float32)
    params = init_params(kp, HIDDEN, OUT)

    # f32 path.
    x_out, v_out = gated_equivariant_block(x, v, params, activation="silu",
                                           scalar_activation=False)
    jax.block_until_ready((x_out, v_out))
    x_ref, v_ref = gated_equivariant_block_ref(x, v, params)
    assert x_out.shape == (N, OUT) and v_out.shape == (N, 3, OUT)
    assert jnp.allclose(x_out, x_ref, atol=1e-3, rtol=1e-3)
    assert jnp.allclose(v_out, v_ref, atol=1e-3, rtol=1e-3)

    # Ragged N (multi-step grid + masked partial final block) + scalar act.
    N2 = 600
    x2 = jax.random.normal(jax.random.PRNGKey(1), (N2, HIDDEN), jnp.float32)
    v2 = jax.random.normal(jax.random.PRNGKey(2), (N2, 3, HIDDEN), jnp.float32)
    x2_out, v2_out = gated_equivariant_block(x2, v2, params,
                                             scalar_activation=True)
    jax.block_until_ready((x2_out, v2_out))
    x2_ref, v2_ref = gated_equivariant_block_ref(x2, v2, params,
                                                 scalar_activation=True)
    assert x2_out.shape == (N2, OUT) and v2_out.shape == (N2, 3, OUT)
    assert jnp.allclose(x2_out, x2_ref, atol=1e-3, rtol=1e-3)
    assert jnp.allclose(v2_out, v2_ref, atol=1e-3, rtol=1e-3)

    # bf16-streaming path (bandwidth optimization for v5e/v6e); f32 accumulate,
    # loose tolerance vs the f32 reference.
    x3_out, v3_out = gated_equivariant_block(x, v, params,
                                             use_bf16_inputs=True)
    jax.block_until_ready((x3_out, v3_out))
    assert jnp.allclose(x3_out, x_ref, atol=1e-1, rtol=1e-1)
    assert jnp.allclose(v3_out, v_ref, atol=1e-1, rtol=1e-1)

    print("KERNEL_OK")
</pallas_src>

<mosaic_0001>
module attributes {stable_mosaic.version = 11 : i64} {
  func.func @_geb_kernel(%arg0: i32, %arg1: memref<8x32xf32, #tpu.memory_space<vmem>>, %arg2: memref<8x96xf32, #tpu.memory_space<vmem>>, %arg3: memref<32x32xf32, #tpu.memory_space<vmem>>, %arg4: memref<32x16xf32, #tpu.memory_space<vmem>>, %arg5: memref<64x32xf32, #tpu.memory_space<vmem>>, %arg6: memref<1x32xf32, #tpu.memory_space<vmem>>, %arg7: memref<32x32xf32, #tpu.memory_space<vmem>>, %arg8: memref<1x32xf32, #tpu.memory_space<vmem>>, %arg9: memref<8x16xf32, #tpu.memory_space<vmem>>, %arg10: memref<8x48xf32, #tpu.memory_space<vmem>>) attributes {dimension_semantics = [#tpu.dimension_semantics<parallel>], iteration_bounds = array<i64: 1>, scalar_prefetch = 0 : i64, scratch_operands = 0 : i64, tpu.core_type = #tpu.core_type<tc>, window_params = [{transform_indices = @transform_0, window_bounds = array<i64: 8, 32>}, {transform_indices = @transform_1, window_bounds = array<i64: 8, 96>}, {pipeline_mode = #tpu.pipeline_mode<synchronous>, transform_indices = @transform_2, window_bounds = array<i64: 32, 32>}, {pipeline_mode = #tpu.pipeline_mode<synchronous>, transform_indices = @transform_3, window_bounds = array<i64: 32, 16>}, {pipeline_mode = #tpu.pipeline_mode<synchronous>, transform_indices = @transform_4, window_bounds = array<i64: 64, 32>}, {pipeline_mode = #tpu.pipeline_mode<synchronous>, transform_indices = @transform_5, window_bounds = array<i64: 1, 32>}, {pipeline_mode = #tpu.pipeline_mode<synchronous>, transform_indices = @transform_6, window_bounds = array<i64: 32, 32>}, {pipeline_mode = #tpu.pipeline_mode<synchronous>, transform_indices = @transform_7, window_bounds = array<i64: 1, 32>}, {transform_indices = @transform_8, window_bounds = array<i64: 8, 16>}, {transform_indices = @transform_9, window_bounds = array<i64: 8, 48>}]} {
    %c0 = arith.constant 0 : index
    %c0_0 = arith.constant 0 : index
    %0 = vector.load %arg1[%c0, %c0_0] : memref<8x32xf32, #tpu.memory_space<vmem>>, vector<8x32xf32>
    %c0_1 = arith.constant 0 : index
    %c0_2 = arith.constant 0 : index
    %1 = vector.load %arg2[%c0_1, %c0_2] : memref<8x96xf32, #tpu.memory_space<vmem>>, vector<8x96xf32>
    %2 = vector.extract_strided_slice %1 {offsets = [0, 0], sizes = [8, 32], strides = [1, 1]} : vector<8x96xf32> to vector<8x32xf32>
    %3 = vector.extract_strided_slice %1 {offsets = [0, 32], sizes = [8, 32], strides = [1, 1]} : vector<8x96xf32> to vector<8x32xf32>
    %4 = vector.extract_strided_slice %1 {offsets = [0, 64], sizes = [8, 32], strides = [1, 1]} : vector<8x96xf32> to vector<8x32xf32>
    %5 = tpu.concatenate %2, %3, %4 in 0 : vector<8x32xf32>, vector<8x32xf32>, vector<8x32xf32> -> vector<24x32xf32>
    %c0_3 = arith.constant 0 : index
    %c0_4 = arith.constant 0 : index
    %6 = vector.load %arg3[%c0_3, %c0_4] : memref<32x32xf32, #tpu.memory_space<vmem>>, vector<32x32xf32>
    %cst = arith.constant dense<0.000000e+00> : vector<24x32xf32>
    %7 = tpu.matmul %5, %6, %cst {dimension_numbers = #tpu.dot_dimension_numbers<[1], [0], [0], [1], [0, 0, 1, 1], [], []>} : vector<24x32xf32>, vector<32x32xf32>, vector<24x32xf32> -> vector<24x32xf32>
    %c0_5 = arith.constant 0 : index
    %c0_6 = arith.constant 0 : index
    %8 = vector.load %arg4[%c0_5, %c0_6] : memref<32x16xf32, #tpu.memory_space<vmem>>, vector<32x16xf32>
    %cst_7 = arith.constant dense<0.000000e+00> : vector<24x16xf32>
    %9 = tpu.matmul %5, %8, %cst_7 {dimension_numbers = #tpu.dot_dimension_numbers<[1], [0], [0], [1], [0, 0, 1, 1], [], []>} : vector<24x32xf32>, vector<32x16xf32>, vector<24x16xf32> -> vector<24x16xf32>
    %10 = arith.mulf %7, %7 : vector<24x32xf32>
    %11 = vector.extract_strided_slice %10 {offsets = [0, 0], sizes = [8, 32], strides = [1, 1]} : vector<24x32xf32> to vector<8x32xf32>
    %12 = vector.extract_strided_slice %10 {offsets = [8, 0], sizes = [8, 32], strides = [1, 1]} : vector<24x32xf32> to vector<8x32xf32>
    %13 = arith.addf %11, %12 : vector<8x32xf32>
    %14 = vector.extract_strided_slice %10 {offsets = [16, 0], sizes = [8, 32], strides = [1, 1]} : vector<24x32xf32> to vector<8x32xf32>
    %15 = arith.addf %13, %14 : vector<8x32xf32>
    %16 = math.sqrt %15 : vector<8x32xf32>
    %17 = tpu.concatenate %0, %16 in 1 : vector<8x32xf32>, vector<8x32xf32> -> vector<8x64xf32>
    %c0_8 = arith.constant 0 : index
    %c0_9 = arith.constant 0 : index
    %18 = vector.load %arg5[%c0_8, %c0_9] : memref<64x32xf32, #tpu.memory_space<vmem>>, vector<64x32xf32>
    %cst_10 = arith.constant dense<0.000000e+00> : vector<8x32xf32>
    %19 = tpu.matmul %17, %18, %cst_10 {dimension_numbers = #tpu.dot_dimension_numbers<[1], [0], [0], [1], [0, 0, 1, 1], [], []>} : vector<8x64xf32>, vector<64x32xf32>, vector<8x32xf32> -> vector<8x32xf32>
    %c0_11 = arith.constant 0 : index
    %c0_12 = arith.constant 0 : index
    %20 = vector.load %arg6[%c0_11, %c0_12] : memref<1x32xf32, #tpu.memory_space<vmem>>, vector<1x32xf32>
    %21 = vector.broadcast %20 : vector<1x32xf32> to vector<8x32xf32>
    %22 = arith.addf %19, %21 : vector<8x32xf32>
    %23 = arith.negf %22 : vector<8x32xf32>
    %24 = math.exp %23 : vector<8x32xf32>
    %cst_13 = arith.constant 1.000000e+00 : f32
    %25 = vector.broadcast %cst_13 : f32 to vector<8x32xf32>
    %26 = arith.addf %25, %24 : vector<8x32xf32>
    %27 = arith.divf %25, %26 : vector<8x32xf32>
    %28 = arith.mulf %22, %27 : vector<8x32xf32>
    %c0_14 = arith.constant 0 : index
    %c0_15 = arith.constant 0 : index
    %29 = vector.load %arg7[%c0_14, %c0_15] : memref<32x32xf32, #tpu.memory_space<vmem>>, vector<32x32xf32>
    %cst_16 = arith.constant dense<0.000000e+00> : vector<8x32xf32>
    %30 = tpu.matmul %28, %29, %cst_16 {dimension_numbers = #tpu.dot_dimension_numbers<[1], [0], [0], [1], [0, 0, 1, 1], [], []>} : vector<8x32xf32>, vector<32x32xf32>, vector<8x32xf32> -> vector<8x32xf32>
    %c0_17 = arith.constant 0 : index
    %c0_18 = arith.constant 0 : index
    %31 = vector.load %arg8[%c0_17, %c0_18] : memref<1x32xf32, #tpu.memory_space<vmem>>, vector<1x32xf32>
    %32 = vector.broadcast %31 : vector<1x32xf32> to vector<8x32xf32>
    %33 = arith.addf %30, %32 : vector<8x32xf32>
    %34 = vector.extract_strided_slice %33 {offsets = [0, 0], sizes = [8, 16], strides = [1, 1]} : vector<8x32xf32> to vector<8x16xf32>
    %35 = vector.extract_strided_slice %33 {offsets = [0, 16], sizes = [8, 16], strides = [1, 1]} : vector<8x32xf32> to vector<8x16xf32>
    %c0_19 = arith.constant 0 : index
    %c0_20 = arith.constant 0 : index
    %36 = vector.load %arg9[%c0_19, %c0_20] : memref<8x16xf32, #tpu.memory_space<vmem>>, vector<8x16xf32>
    tpu.vector_store %arg9[%c0_19, %c0_20], %34 {strides = array<i32>} : memref<8x16xf32, #tpu.memory_space<vmem>>, vector<8x16xf32>,
    %37 = vector.extract_strided_slice %9 {offsets = [0, 0], sizes = [8, 16], strides = [1, 1]} : vector<24x16xf32> to vector<8x16xf32>
    %38 = arith.mulf %35, %37 : vector<8x16xf32>
    %39 = vector.extract_strided_slice %9 {offsets = [8, 0], sizes = [8, 16], strides = [1, 1]} : vector<24x16xf32> to vector<8x16xf32>
    %40 = arith.mulf %35, %39 : vector<8x16xf32>
    %41 = vector.extract_strided_slice %9 {offsets = [16, 0], sizes = [8, 16], strides = [1, 1]} : vector<24x16xf32> to vector<8x16xf32>
    %42 = arith.mulf %35, %41 : vector<8x16xf32>
    %43 = tpu.concatenate %38, %40, %42 in 1 : vector<8x16xf32>, vector<8x16xf32>, vector<8x16xf32> -> vector<8x48xf32>
    %c0_21 = arith.constant 0 : index
    %c0_22 = arith.constant 0 : index
    %44 = vector.load %arg10[%c0_21, %c0_22] : memref<8x48xf32, #tpu.memory_space<vmem>>, vector<8x48xf32>
    tpu.vector_store %arg10[%c0_21, %c0_22], %43 {strides = array<i32>} : memref<8x48xf32, #tpu.memory_space<vmem>>, vector<8x48xf32>,
    return
  }
  func.func @transform_0(%arg0: i32) -> (i32, i32) {
    %c0_i32 = arith.constant 0 : i32
    %c0_i32_0 = arith.constant 0 : i32
    return %arg0, %c0_i32 : i32, i32
  }
  func.func @transform_1(%arg0: i32) -> (i32, i32) {
    %c0_i32 = arith.constant 0 : i32
    %c0_i32_0 = arith.constant 0 : i32
    return %arg0, %c0_i32 : i32, i32
  }
  func.func @transform_2(%arg0: i32) -> (i32, i32) {
    %c0_i32 = arith.constant 0 : i32
    %c0_i32_0 = arith.constant 0 : i32
    %c0_i32_1 = arith.constant 0 : i32
    return %c0_i32, %c0_i32_0 : i32, i32
  }
  func.func @transform_3(%arg0: i32) -> (i32, i32) {
    %c0_i32 = arith.constant 0 : i32
    %c0_i32_0 = arith.constant 0 : i32
    %c0_i32_1 = arith.constant 0 : i32
    return %c0_i32, %c0_i32_0 : i32, i32
  }
  func.func @transform_4(%arg0: i32) -> (i32, i32) {
    %c0_i32 = arith.constant 0 : i32
    %c0_i32_0 = arith.constant 0 : i32
    %c0_i32_1 = arith.constant 0 : i32
    return %c0_i32, %c0_i32_0 : i32, i32
  }
  func.func @transform_5(%arg0: i32) -> (i32, i32) {
    %c0_i32 = arith.constant 0 : i32
    %c0_i32_0 = arith.constant 0 : i32
    %c0_i32_1 = arith.constant 0 : i32
    return %c0_i32, %c0_i32_0 : i32, i32
  }
  func.func @transform_6(%arg0: i32) -> (i32, i32) {
    %c0_i32 = arith.constant 0 : i32
    %c0_i32_0 = arith.constant 0 : i32
    %c0_i32_1 = arith.constant 0 : i32
    return %c0_i32, %c0_i32_0 : i32, i32
  }
  func.func @transform_7(%arg0: i32) -> (i32, i32) {
    %c0_i32 = arith.constant 0 : i32
    %c0_i32_0 = arith.constant 0 : i32
    %c0_i32_1 = arith.constant 0 : i32
    return %c0_i32, %c0_i32_0 : i32, i32
  }
  func.func @transform_8(%arg0: i32) -> (i32, i32) {
    %c0_i32 = arith.constant 0 : i32
    %c0_i32_0 = arith.constant 0 : i32
    return %arg0, %c0_i32 : i32, i32
  }
  func.func @transform_9(%arg0: i32) -> (i32, i32) {
    %c0_i32 = arith.constant 0 : i32
    %c0_i32_0 = arith.constant 0 : i32
    return %arg0, %c0_i32 : i32, i32
  }
}

</mosaic_0001>

<llo_original>
// kernel: tpu_custom_call.1
$region0: #{tpu_custom_call.1}
  #allocation0 [shape = 'u32[]', space=smem, size = 0x4, offset = 0x4, fixed_abs, tag = 'smem constant byte address 0x4 - core index']
  #allocation1 [shape = 'u32[72,128]{1,0:T(1,128)}', space=vmem, size = 0x9000, scoped, tag = 'internal scratch']
  %s0 = inlined_call_operand.vmem [shape: f32[8,32], index: 0, kind: input, shape index: {}]
  %s1 = inlined_call_operand.vmem [shape: f32[8,96], index: 1, kind: input, shape index: {}]
  %s2 = inlined_call_operand.vmem [shape: f32[32,32], index: 2, kind: input, shape index: {}]
  %s3 = inlined_call_operand.vmem [shape: f32[32,16], index: 3, kind: input, shape index: {}]
  %s4 = inlined_call_operand.vmem [shape: f32[64,32], index: 4, kind: input, shape index: {}]
  %s5 = inlined_call_operand.vmem [shape: f32[1,32], index: 5, kind: input, shape index: {}]
  %s6 = inlined_call_operand.vmem [shape: f32[32,32], index: 6, kind: input, shape index: {}]
  %s7 = inlined_call_operand.vmem [shape: f32[1,32], index: 7, kind: input, shape index: {}]
  %s8 = inlined_call_operand.hbm [shape: f32[8,16], index: 8, kind: output, shape index: {0}]
  %s9 = inlined_call_operand.hbm [shape: f32[8,48], index: 9, kind: output, shape index: {1}]
  %10 = xla_tuple %s8, %s9
  %s11 = sld [smem:[#allocation0]]
  $region50: #{tpu_custom_call.1} parent=0
    _
  %s13 = ssub.s32 1, %s11
  %s14 = scalar_select 0, %s13, %s11
  $region1: #{tpu_custom_call.1} parent=0
    #allocation2 [shape = 'u8[4096]{0}', space=vmem, size = 0x1000, scoped, tag = 'output window, operand 0, single buffered']
    #allocation3 [shape = 's32[1]{0}', space=sflag, size = 0x4, scoped, tag = 'scoped memory for tpu_custom_call.1']
    #allocation4 [shape = 'u8[4096]{0}', space=vmem, size = 0x1000, scoped, tag = 'output window, operand 1, single buffered']
    #allocation5 [shape = 's32[1]{0}', space=sflag, size = 0x4, scoped, tag = 'scoped memory for tpu_custom_call.1']
    %15 = vsyncpa [#allocation3], 0
    %16 = vsyncpa [#allocation5], 0
    // Predicated region
    $region2: #{tpu_custom_call.1} parent=1 // pred_check
      _
    $region3: #{tpu_custom_call.1} parent=1 // pred_check_branch
      %18 = sbr.rel (0) target = $region5
    $region4: #{tpu_custom_call.1} parent=1 // pred_region
      _
    $region5: #{tpu_custom_call.1} parent=1 // pred_fallthru
      _
    // Predicated region
    $region6: #{tpu_custom_call.1} parent=1 // pred_check
      _
    $region7: #{tpu_custom_call.1} parent=1 // pred_check_branch
      %20 = sbr.rel (0) target = $region9
    $region8: #{tpu_custom_call.1} parent=1 // pred_region
      _
    $region9: #{tpu_custom_call.1} parent=1 // pred_fallthru
      _
    // Predicated region
    $region10: #{tpu_custom_call.1} parent=1 // pred_check
      _
    $region11: #{tpu_custom_call.1} parent=1 // pred_check_branch
      %22 = sbr.rel (0) target = $region13
    $region12: #{tpu_custom_call.1} parent=1 // pred_region
      _
    $region13: #{tpu_custom_call.1} parent=1 // pred_fallthru
      _
    // Predicated region
    $region14: #{tpu_custom_call.1} parent=1 // pred_check
      _
    $region15: #{tpu_custom_call.1} parent=1 // pred_check_branch
      %24 = sbr.rel (0) target = $region17
    $region16: #{tpu_custom_call.1} parent=1 // pred_region
      _
    $region17: #{tpu_custom_call.1} parent=1 // pred_fallthru
      _
    // Predicated region
    $region18: #{tpu_custom_call.1} parent=1 // pred_check
      _
    $region19: #{tpu_custom_call.1} parent=1 // pred_check_branch
      %26 = sbr.rel (0) target = $region21
    $region20: #{tpu_custom_call.1} parent=1 // pred_region
      _
    $region21: #{tpu_custom_call.1} parent=1 // pred_fallthru
      _
    // Predicated region
    $region22: #{tpu_custom_call.1} parent=1 // pred_check
      _
    $region23: #{tpu_custom_call.1} parent=1 // pred_check_branch
      %28 = sbr.rel (0) target = $region25
    $region24: #{tpu_custom_call.1} parent=1 // pred_region
      _
    $region25: #{tpu_custom_call.1} parent=1 // pred_fallthru
      _
    // Predicated region
    $region26: #{tpu_custom_call.1} parent=1 // pred_check
      _
    $region27: #{tpu_custom_call.1} parent=1 // pred_check_branch
      %30 = sbr.rel (0) target = $region29
    $region28: #{tpu_custom_call.1} parent=1 // pred_region
      _
    $region29: #{tpu_custom_call.1} parent=1 // pred_fallthru
      _
    // Predicated region
    $region30: #{tpu_custom_call.1} parent=1 // pred_check
      _
    $region31: #{tpu_custom_call.1} parent=1 // pred_check_branch
      %32 = sbr.rel (0) target = $region33
    $region32: #{tpu_custom_call.1} parent=1 // pred_region
      _
    $region33: #{tpu_custom_call.1} parent=1 // pred_fallthru
      _
    %v33 = vld [vmem:[%s0] sm:$0xff]
    %v34 = vld [vmem:[%s1] sm:$0xff]
    %36 = vrot.lane.b32.xlu0 %v34, 96
    %v37 = vpop.permute.xlu0 %36
    %38 = vrot.lane.b32.xlu0 %v34, 64
    %v39 = vpop.permute.xlu0 %38
    %v40 = vld [vmem:[%s2] sm:$0xff]
    %v41 = vld [vmem:[%s2 + $0x8] sm:$0xff]
    %v42 = vld [vmem:[%s2 + $0x10] sm:$0xff]
    %v43 = vld [vmem:[%s2 + $0x18] sm:$0xff]
    %vm44 = vcmask 261120
    %v45 = vsel %vm44, %v34, 0
    %v47 = vsel %vm44, %v37, 0
    %v49 = vsel %vm44, %v39, 0
    %51 = vmatpush.msra.mxu0 0.0
    %52 = vmatpush.msra.mxu0 0.0
    %53 = vmatpush.msra.mxu0 0.0
    %54 = vmatpush.msra.mxu0 0.0
    %55 = vmatpush.msra.mxu0 0.0
    %56 = vmatpush.msra.mxu0 0.0
    %57 = vmatpush.msra.mxu0 0.0
    %58 = vmatpush.msra.mxu0 0.0
    %59 = vmatpush.msra.mxu0 0.0
    %60 = vmatpush.msra.mxu0 0.0
    %61 = vmatpush.msra.mxu0 0.0
    %62 = vmatpush.msra.mxu0 0.0
    %63 = vmatpush.msra.mxu0 %v43
    %64 = vmatpush.msra.mxu0 %v42
    %65 = vmatpush.msra.mxu0 %v41
    %66 = vmatpush.msra.mxu0 %v40
    %67 = vmatmul.f32.gmra.mxu0 %v45
    %v68 = vpop.f32.mrf.mxu0
    %v69 = vadd.f32 0.0, %v68
    %70 = vmatmul.f32.gmra.mxu0 %v47
    %v71 = vpop.f32.mrf.mxu0
    %v72 = vadd.f32 0.0, %v71
    %73 = vmatmul.f32.gmra.mxu0 %v49
    %v74 = vpop.f32.mrf.mxu0
    %v75 = vadd.f32 0.0, %v74
    %76 = vdwg.mxu0
    %v77 = vld [vmem:[%s3] sm:$0xff]
    %v78 = vld [vmem:[%s3 + $0x8] sm:$0xff]
    %v79 = vld [vmem:[%s3 + $0x10] sm:$0xff]
    %v80 = vld [vmem:[%s3 + $0x18] sm:$0xff]
    %81 = vmatpush.msra.mxu0 0.0
    %82 = vmatpush.msra.mxu0 0.0
    %83 = vmatpush.msra.mxu0 0.0
    %84 = vmatpush.msra.mxu0 0.0
    %85 = vmatpush.msra.mxu0 0.0
    %86 = vmatpush.msra.mxu0 0.0
    %87 = vmatpush.msra.mxu0 0.0
    %88 = vmatpush.msra.mxu0 0.0
    %89 = vmatpush.msra.mxu0 0.0
    %90 = vmatpush.msra.mxu0 0.0
    %91 = vmatpush.msra.mxu0 0.0
    %92 = vmatpush.msra.mxu0 0.0
    %93 = vmatpush.msra.mxu0 %v80
    %94 = vmatpush.msra.mxu0 %v79
    %95 = vmatpush.msra.mxu0 %v78
    %96 = vmatpush.msra.mxu0 %v77
    %97 = vmatmul.f32.gmra.mxu0 %v45
    %v98 = vpop.f32.mrf.mxu0
    %v99 = vadd.f32 0.0, %v98
    %100 = vmatmul.f32.gmra.mxu0 %v47
    %v101 = vpop.f32.mrf.mxu0
    %v102 = vadd.f32 0.0, %v101
    %103 = vmatmul.f32.gmra.mxu0 %v49
    %v104 = vpop.f32.mrf.mxu0
    %v105 = vadd.f32 0.0, %v104
    %106 = vdwg.mxu0
    %v107 = vmul.f32 %v69, %v69
    %v108 = vmul.f32 %v72, %v72
    %v109 = vmul.f32 %v75, %v75
    %v110 = vadd.f32 %v107, %v108
    %v111 = vadd.f32 %v110, %v109
    %v112 = vrsqrt.pop %v111
    %v113 = vmul.f32 %v112, %v111
    %v114 = vmul.f32 %v113, %v112
    %v115 = vmul.f32 0.5, %v114
    %v116 = vsub.f32 1.5, %v115
    %v117 = vmul.f32 %v112, %v116
    %v118 = vmul.f32 %v111, %v117
    %vm119 = vcmp.eq.f32.partialorder %v111, inf
    %v120 = vsel %vm119, %v111, %v118
    %vm121 = vcmp.eq.f32.partialorder %v111, 0.0
    %v122 = vand.u32 %v111, 2147483648
    %v123 = vsel %vm121, %v122, %v120
    %125 = vrot.lane.b32.xlu0 %v123, 32
    %v126 = vpop.permute.xlu0 %125
    %v128 = vsel %vm44, %v33, %v126
    %v129 = vld [vmem:[%s4] sm:$0xff]
    %v130 = vld [vmem:[%s4 + $0x8] sm:$0xff]
    %v131 = vld [vmem:[%s4 + $0x10] sm:$0xff]
    %v132 = vld [vmem:[%s4 + $0x18] sm:$0xff]
    %v133 = vld [vmem:[%s4 + $0x20] sm:$0xff]
    %v134 = vld [vmem:[%s4 + $0x28] sm:$0xff]
    %v135 = vld [vmem:[%s4 + $0x30] sm:$0xff]
    %v136 = vld [vmem:[%s4 + $0x38] sm:$0xff]
    %v137 = vld [vmem:[%s5] sm:$0x1]
    %v139 = vperm.slane %v137, 0
    %vm141 = vcmask 523264
    %v143 = vsel %vm141, %v128, 0
    %145 = vmatpush.msra.mxu0 0.0
    %146 = vmatpush.msra.mxu0 0.0
    %147 = vmatpush.msra.mxu0 0.0
    %148 = vmatpush.msra.mxu0 0.0
    %149 = vmatpush.msra.mxu0 0.0
    %150 = vmatpush.msra.mxu0 0.0
    %151 = vmatpush.msra.mxu0 0.0
    %152 = vmatpush.msra.mxu0 0.0
    %153 = vmatpush.msra.mxu0 %v136
    %154 = vmatpush.msra.mxu0 %v135
    %155 = vmatpush.msra.mxu0 %v134
    %156 = vmatpush.msra.mxu0 %v133
    %157 = vmatpush.msra.mxu0 %v132
    %158 = vmatpush.msra.mxu0 %v131
    %159 = vmatpush.msra.mxu0 %v130
    %160 = vmatpush.msra.mxu0 %v129
    %161 = vmatmul.f32.gmra.mxu0 %v143
    %v162 = vpop.f32.mrf.mxu0
    %v163 = vadd.f32 %v139, %v162
    %164 = vdwg.mxu0
    %v165 = vxor.u32 %v163, 2147483648
    %v166 = vmul.f32 %v165, 1.442695
    %v167 = vpow.pop %v166
    %v168 = vadd.f32 %v167, 1.0
    %v169 = vrcp.pop %v168
    %v170 = vmul.f32 %v168, %v169
    %v171 = vsub.f32 1.0, %v170
    %v172 = vmul.f32 %v169, %v171
    %v173 = vadd.f32 %v169, %v172
    %vm174 = vweird.f32 %v168
    %vm175 = vweird.f32 %v169
    %vm176 = vmor %vm174, %vm175
    %v177 = vsel %vm176, %v169, %v173
    %v178 = vand.u32 2147483647, %v168
    %vm179 = vcmp.eq.f32.partialorder %v178, 8.507059e+37
    %v180 = vand.u32 %v168, 2147483648
    %v181 = vor.u32 1.1754944e-38, %v180
    %v182 = vsel %vm179, %v181, %v177
    %v183 = vmul.f32 1.0, %v182
    %v184 = vmul.f32 %v163, %v183
    %v185 = vld [vmem:[%s6] sm:$0xff]
    %v186 = vld [vmem:[%s6 + $0x8] sm:$0xff]
    %v187 = vld [vmem:[%s6 + $0x10] sm:$0xff]
    %v188 = vld [vmem:[%s6 + $0x18] sm:$0xff]
    %v189 = vld [vmem:[%s7] sm:$0x1]
    %v191 = vperm.slane %v189, 0
    %v194 = vsel %vm44, %v184, 0
    %196 = vmatpush.msra.mxu0 0.0
    %197 = vmatpush.msra.mxu0 0.0
    %198 = vmatpush.msra.mxu0 0.0
    %199 = vmatpush.msra.mxu0 0.0
    %200 = vmatpush.msra.mxu0 0.0
    %201 = vmatpush.msra.mxu0 0.0
    %202 = vmatpush.msra.mxu0 0.0
    %203 = vmatpush.msra.mxu0 0.0
    %204 = vmatpush.msra.mxu0 0.0
    %205 = vmatpush.msra.mxu0 0.0
    %206 = vmatpush.msra.mxu0 0.0
    %207 = vmatpush.msra.mxu0 0.0
    %208 = vmatpush.msra.mxu0 %v188
    %209 = vmatpush.msra.mxu0 %v187
    %210 = vmatpush.msra.mxu0 %v186
    %211 = vmatpush.msra.mxu0 %v185
    %212 = vmatmul.f32.gmra.mxu0 %v194
    %v213 = vpop.f32.mrf.mxu0
    %v214 = vadd.f32 %v191, %v213
    %215 = vdwg.mxu0
    %vm216 = vcmask 130048
    %217 = vst.msk [vmem:[#allocation2] sm:$0xff] %vm216, %v214
    %219 = vrot.lane.b32.xlu0 %v99, 16
    %v220 = vpop.permute.xlu0 %219
    %v222 = vmul.f32 %v214, %v220
    %224 = vrot.lane.b32.xlu0 %v102, 16
    %v225 = vpop.permute.xlu0 %224
    %v227 = vmul.f32 %v214, %v225
    %229 = vrot.lane.b32.xlu0 %v105, 16
    %v230 = vpop.permute.xlu0 %229
    %v232 = vmul.f32 %v214, %v230
    %234 = vrot.lane.b32.xlu0 %v222, 112
    %v235 = vpop.permute.xlu0 %234
    %238 = vrot.lane.b32.xlu0 %v232, 16
    %v239 = vpop.permute.xlu0 %238
    %v241 = vsel %vm216, %v235, %v227
    %v242 = vsel %vm44, %v241, %v239
    %vm243 = vcmask 392192
    %244 = vst.msk [vmem:[#allocation4] sm:$0xff] %vm243, %v242
    // Predicated region
    $region34: #{tpu_custom_call.1} parent=1 // pred_check
      _
    $region35: #{tpu_custom_call.1} parent=1 // pred_check_branch
      %246 = sbr.rel (0) target = $region37
    $region36: #{tpu_custom_call.1} parent=1 // pred_region
      %248 = vsyncadd [#allocation3], 0
      %s250 = sshll.u32 [#allocation2], 4
      %s251 = int_to_ptr.vmem [resolvable:$true] %s250
      %s252 = sshll.u32 %s8, 4
      %s253 = int_to_ptr.hbm [resolvable:$true] %s252
      %255 = dma.vmem_to_hbm [thread:$0]  %s251, 128, %s253, [#allocation3]
    $region37: #{tpu_custom_call.1} parent=1 // pred_fallthru
      _
    // Predicated region
    $region38: #{tpu_custom_call.1} parent=1 // pred_check
      _
    $region39: #{tpu_custom_call.1} parent=1 // pred_check_branch
      %257 = sbr.rel (0) target = $region41
    $region40: #{tpu_custom_call.1} parent=1 // pred_region
      %259 = vsyncadd [#allocation5], 0
      %s261 = sshll.u32 [#allocation4], 4
      %s262 = int_to_ptr.vmem [resolvable:$true] %s261
      %s263 = sshll.u32 %s9, 4
      %s264 = int_to_ptr.hbm [resolvable:$true] %s263
      %266 = dma.vmem_to_hbm [thread:$0]  %s262, 128, %s264, [#allocation5]
    $region41: #{tpu_custom_call.1} parent=1 // pred_fallthru
      _
    // Predicated region
    $region42: #{tpu_custom_call.1} parent=1 // pred_check
      _
    $region43: #{tpu_custom_call.1} parent=1 // pred_check_branch
      %268 = sbr.rel (0) target = $region45
    $region44: #{tpu_custom_call.1} parent=1 // pred_region
      %270 = dma.done [#allocation3], 128
    $region45: #{tpu_custom_call.1} parent=1 // pred_fallthru
      _
    // Predicated region
    $region46: #{tpu_custom_call.1} parent=1 // pred_check
      _
    $region47: #{tpu_custom_call.1} parent=1 // pred_check_branch
      %272 = sbr.rel (0) target = $region49
    $region48: #{tpu_custom_call.1} parent=1 // pred_region
      %274 = dma.done [#allocation5], 128
    $region49: #{tpu_custom_call.1} parent=1 // pred_fallthru
      _
    %275 = vsyncpa [#allocation3], 1
    %276 = vsyncpa [#allocation5], 1

</llo_original>
